<compile_context>
chip_gen: v5e
topology: v5e:2x2
jax: 0.10.0
libtpu: 0.0.40
codegen_flags: <defaults>
</compile_context>

<pallas_src>
import jax
import jax.numpy as jnp
from jax.experimental import pallas as pl
from jax.experimental.pallas import tpu as pltpu


def _round_up(a, b):
    return (a + b - 1) // b * b


def _vmem_capacity_bytes():
    """Per-generation VMEM capacity; conservative 64 MiB (v7x) fallback."""
    try:
        return int(pltpu.get_tpu_info().vmem_capacity_bytes)
    except Exception:  # capacity query only -- never swallows kernel errors
        return 64 * 1024 * 1024


def mln_kernel(x_ref, c_ref, wr_ref, br_ref, wgb_ref, bgb_ref, o_ref):
    """Processes one (tile_n, f_dim) tile of tokens."""
    f_dim = x_ref.shape[-1]

    # ---- LayerNorm(x) over the full last dim (eps=1e-5, no affine) ----
    x = x_ref[...].astype(jnp.float32)                       # (TN, F)
    mean = jnp.mean(x, axis=-1, keepdims=True)
    xc = x - mean
    var = jnp.mean(xc * xc, axis=-1, keepdims=True)
    x_n = xc * jax.lax.rsqrt(var + 1e-5)

    # ---- reduce: Linear(c_dim -> f_dim) + ReLU (bf16 MXU, f32 accum) ----
    cv = c_ref[...].astype(wr_ref.dtype)                     # (TN, C)
    h = jnp.dot(cv, wr_ref[...], preferred_element_type=jnp.float32)
    h = jnp.maximum(h + br_ref[...], 0.0)                    # (TN, F) f32

    # ---- fused gamma/beta head: one (F, 2F) matmul, one bias add ----
    gb = jnp.dot(h.astype(wgb_ref.dtype), wgb_ref[...],
                 preferred_element_type=jnp.float32)
    gb = gb + bgb_ref[...]                                   # (TN, 2F) f32
    gamma = gb[:, :f_dim]
    beta = gb[:, f_dim:]

    # ---- modulate ----
    o_ref[...] = (gamma * x_n + beta).astype(o_ref.dtype)


def mln_forward(x, c, params, *, tile_n=None, mxu_dtype=jnp.bfloat16):
    """x: (..., f_dim), c: (..., c_dim). Returns the same shape/dtype as x."""
    f_dim = x.shape[-1]
    c_dim = c.shape[-1]
    lead = x.shape[:-1]
    assert c.shape[:-1] == lead

    x2 = x.reshape(-1, f_dim)
    c2 = c.reshape(-1, c_dim)
    n = x2.shape[0]

    # Weights cast to bf16 for the MXU (f32 accumulation); biases stay f32.
    wr_t = params["reduce_w"].T.astype(mxu_dtype)                     # (C, F)
    br = params["reduce_b"].astype(jnp.float32).reshape(1, f_dim)     # (1, F)
    wgb = jnp.concatenate([params["gamma_w"].T, params["beta_w"].T],
                          axis=1).astype(mxu_dtype)                   # (F, 2F)
    bgb = jnp.concatenate([params["gamma_b"], params["beta_b"]]
                          ).astype(jnp.float32).reshape(1, 2 * f_dim)  # (1,2F)

    # ---- tile_n sizing against a per-generation VMEM budget ----
    x_itm = jnp.dtype(x.dtype).itemsize
    c_itm = jnp.dtype(c.dtype).itemsize
    w_itm = jnp.dtype(mxu_dtype).itemsize
    # Grid-invariant weights/biases (constant index_map -> DMA'd once);
    # conservatively counted with double-buffering.
    weight_bytes = 2 * (w_itm * (c_dim * f_dim + 2 * f_dim * f_dim)
                        + 4 * 3 * f_dim)
    # Per token row: double-buffered x / c / out tiles + f32 in-kernel
    # intermediates (x, xc, x_n, h, h_bf16, gb, out-temp ~ 8*F + 2*C words).
    per_row = (2 * (x_itm * f_dim + c_itm * c_dim + x_itm * f_dim)
               + 4 * (8 * f_dim + 2 * c_dim))

    cap = _vmem_capacity_bytes()
    budget = int(0.70 * cap)
    avail = max(budget - weight_bytes - (2 << 20), per_row * 8)
    max_tile = max(8, min(1024, (avail // per_row) // 8 * 8))

    if tile_n is None:
        if n >= 16:
            # >= 2 grid steps so ("parallel",) can shard across v7x's 2 TCs;
            # near-neutral on single-TC v5e/v6e.
            tile_n = min(max_tile, _round_up(-(-n // 2), 8))
        else:
            tile_n = n          # single full-array-dim block (any n, incl. <8)
    else:
        tile_n = max(1, min(int(tile_n), n))
        if tile_n < n:
            tile_n = max(8, (tile_n // 8) * 8)

    grid = (pl.cdiv(n, tile_n),)

    est = weight_bytes + per_row * tile_n + (2 << 20)
    vmem_limit = int(min(max(est * 3 // 2, 32 << 20), (cap * 9) // 10))

    out = pl.pallas_call(
        mln_kernel,
        out_shape=jax.ShapeDtypeStruct((n, f_dim), x.dtype),
        grid_spec=pltpu.PrefetchScalarGridSpec(
            num_scalar_prefetch=0,
            grid=grid,
            in_specs=[
                pl.BlockSpec((tile_n, f_dim), lambda i: (i, 0)),       # x
                pl.BlockSpec((tile_n, c_dim), lambda i: (i, 0)),       # c
                pl.BlockSpec((c_dim, f_dim), lambda i: (0, 0)),        # Wr^T
                pl.BlockSpec((1, f_dim), lambda i: (0, 0)),            # br
                pl.BlockSpec((f_dim, 2 * f_dim), lambda i: (0, 0)),    # [Wg^T|Wb^T]
                pl.BlockSpec((1, 2 * f_dim), lambda i: (0, 0)),        # [bg|bb]
            ],
            out_specs=pl.BlockSpec((tile_n, f_dim), lambda i: (i, 0)),
        ),
        compiler_params=pltpu.CompilerParams(
            dimension_semantics=("parallel",),
            vmem_limit_bytes=vmem_limit),
    )(x2, c2, wr_t, br, wgb, bgb)

    return out.reshape(*lead, f_dim)


def init_mln_params(key, c_dim, f_dim, dtype=jnp.float32):
    """Matches MLN.__init__ / init_weight:
       - reduce Linear: PyTorch-default-like uniform init (deterministic)
       - gamma: weight=0, bias=1 ; beta: weight=0, bias=0
    """
    k1, k2 = jax.random.split(key)
    bound = 1.0 / jnp.sqrt(c_dim)
    return {
        "reduce_w": jax.random.uniform(k1, (f_dim, c_dim), dtype, -bound, bound),
        "reduce_b": jax.random.uniform(k2, (f_dim,), dtype, -bound, bound),
        "gamma_w": jnp.zeros((f_dim, f_dim), dtype),
        "gamma_b": jnp.ones((f_dim,), dtype),
        "beta_w": jnp.zeros((f_dim, f_dim), dtype),
        "beta_b": jnp.zeros((f_dim,), dtype),
    }


def mln_reference(x, c, p):
    """Pure-JAX f32 reference (highest-precision matmuls)."""
    hp = jax.lax.Precision.HIGHEST
    mean = jnp.mean(x, axis=-1, keepdims=True)
    var = jnp.mean((x - mean) ** 2, axis=-1, keepdims=True)
    x_n = (x - mean) / jnp.sqrt(var + 1e-5)
    h = jnp.maximum(jnp.dot(c, p["reduce_w"].T, precision=hp) + p["reduce_b"], 0.0)
    gamma = jnp.dot(h, p["gamma_w"].T, precision=hp) + p["gamma_b"]
    beta = jnp.dot(h, p["beta_w"].T, precision=hp) + p["beta_b"]
    return gamma * x_n + beta


if __name__ == "__main__":
    key = jax.random.PRNGKey(0)
    keys = jax.random.split(key, 9)
    batch, num_query = 2, 8
    c_dim, f_dim = 16, 32

    params = init_mln_params(keys[0], c_dim, f_dim)

    # Case 1: faithful module init (gamma W=0/b=1, beta W=0/b=0); n=16 tokens
    # -> 2 grid steps. Exact path (gamma/beta are pure biases), tight tol.
    x1 = jax.random.normal(keys[1], (batch, num_query, f_dim), jnp.float32)
    c1 = jax.random.normal(keys[2], (batch, num_query, c_dim), jnp.float32)
    out1 = jax.block_until_ready(mln_forward(x1, c1, params))
    ref1 = mln_reference(x1, c1, params)
    assert out1.shape == x1.shape
    assert jnp.allclose(out1, ref1, atol=1e-5, rtol=1e-5), (
        f"case1 max abs err = {float(jnp.max(jnp.abs(out1 - ref1)))}")

    # Case 2: nonzero gamma/beta weights, n=15 tokens (non-multiple-of-8,
    # single full-array-dim row block). bf16 MXU vs f32 reference -> loose tol.
    params2 = dict(params)
    params2["gamma_w"] = 0.1 * jax.random.normal(keys[3], (f_dim, f_dim), jnp.float32)
    params2["beta_w"] = 0.1 * jax.random.normal(keys[4], (f_dim, f_dim), jnp.float32)
    x2 = jax.random.normal(keys[5], (3, 5, f_dim), jnp.float32)
    c2 = jax.random.normal(keys[6], (3, 5, c_dim), jnp.float32)
    out2 = jax.block_until_ready(mln_forward(x2, c2, params2))
    ref2 = mln_reference(x2, c2, params2)
    assert out2.shape == x2.shape
    assert jnp.allclose(out2, ref2, atol=2e-2, rtol=2e-2), (
        f"case2 max abs err = {float(jnp.max(jnp.abs(out2 - ref2)))}")

    # Case 3: n=52 tokens -> 2 grid steps with a ragged (partial) last tile.
    x3 = jax.random.normal(keys[7], (4, 13, f_dim), jnp.float32)
    c3 = jax.random.normal(keys[8], (4, 13, c_dim), jnp.float32)
    out3 = jax.block_until_ready(mln_forward(x3, c3, params2))
    ref3 = mln_reference(x3, c3, params2)
    assert out3.shape == x3.shape
    assert jnp.allclose(out3, ref3, atol=2e-2, rtol=2e-2), (
        f"case3 max abs err = {float(jnp.max(jnp.abs(out3 - ref3)))}")

    print("KERNEL_OK")
</pallas_src>

<mosaic_0001>
module attributes {stable_mosaic.version = 11 : i64} {
  func.func @mln_kernel(%arg0: i32, %arg1: memref<8x32xf32, #tpu.memory_space<vmem>>, %arg2: memref<8x16xf32, #tpu.memory_space<vmem>>, %arg3: memref<16x32xbf16, #tpu.memory_space<vmem>>, %arg4: memref<1x32xf32, #tpu.memory_space<vmem>>, %arg5: memref<32x64xbf16, #tpu.memory_space<vmem>>, %arg6: memref<1x64xf32, #tpu.memory_space<vmem>>, %arg7: memref<8x32xf32, #tpu.memory_space<vmem>>) attributes {dimension_semantics = [#tpu.dimension_semantics<parallel>], iteration_bounds = array<i64: 2>, scalar_prefetch = 0 : i64, scratch_operands = 0 : i64, tpu.core_type = #tpu.core_type<tc>, window_params = [{transform_indices = @transform_0, window_bounds = array<i64: 8, 32>}, {transform_indices = @transform_1, window_bounds = array<i64: 8, 16>}, {pipeline_mode = #tpu.pipeline_mode<synchronous>, transform_indices = @transform_2, window_bounds = array<i64: 16, 32>}, {pipeline_mode = #tpu.pipeline_mode<synchronous>, transform_indices = @transform_3, window_bounds = array<i64: 1, 32>}, {pipeline_mode = #tpu.pipeline_mode<synchronous>, transform_indices = @transform_4, window_bounds = array<i64: 32, 64>}, {pipeline_mode = #tpu.pipeline_mode<synchronous>, transform_indices = @transform_5, window_bounds = array<i64: 1, 64>}, {transform_indices = @transform_6, window_bounds = array<i64: 8, 32>}]} {
    %c0 = arith.constant 0 : index
    %c0_0 = arith.constant 0 : index
    %0 = vector.load %arg1[%c0, %c0_0] : memref<8x32xf32, #tpu.memory_space<vmem>>, vector<8x32xf32>
    %cst = arith.constant dense<0.000000e+00> : vector<8xf32>
    %1 = vector.multi_reduction <add>, %0, %cst [1] : vector<8x32xf32> to vector<8xf32>
    %2 = vector.shape_cast %1 : vector<8xf32> to vector<8x1xf32>
    %cst_1 = arith.constant 3.200000e+01 : f32
    %3 = vector.broadcast %cst_1 : f32 to vector<8x1xf32>
    %4 = arith.divf %2, %3 : vector<8x1xf32>
    %5 = vector.broadcast %4 : vector<8x1xf32> to vector<8x32xf32>
    %6 = arith.subf %0, %5 : vector<8x32xf32>
    %7 = arith.mulf %6, %6 : vector<8x32xf32>
    %cst_2 = arith.constant dense<0.000000e+00> : vector<8xf32>
    %8 = vector.multi_reduction <add>, %7, %cst_2 [1] : vector<8x32xf32> to vector<8xf32>
    %9 = vector.shape_cast %8 : vector<8xf32> to vector<8x1xf32>
    %cst_3 = arith.constant 3.200000e+01 : f32
    %10 = vector.broadcast %cst_3 : f32 to vector<8x1xf32>
    %11 = arith.divf %9, %10 : vector<8x1xf32>
    %cst_4 = arith.constant 9.99999974E-6 : f32
    %12 = vector.broadcast %cst_4 : f32 to vector<8x1xf32>
    %13 = arith.addf %11, %12 : vector<8x1xf32>
    %14 = math.rsqrt %13 : vector<8x1xf32>
    %15 = vector.broadcast %14 : vector<8x1xf32> to vector<8x32xf32>
    %16 = arith.mulf %6, %15 : vector<8x32xf32>
    %c0_5 = arith.constant 0 : index
    %c0_6 = arith.constant 0 : index
    %17 = vector.load %arg2[%c0_5, %c0_6] : memref<8x16xf32, #tpu.memory_space<vmem>>, vector<8x16xf32>
    %18 = arith.truncf %17 : vector<8x16xf32> to vector<8x16xbf16>
    %c0_7 = arith.constant 0 : index
    %c0_8 = arith.constant 0 : index
    %19 = vector.load %arg3[%c0_7, %c0_8] : memref<16x32xbf16, #tpu.memory_space<vmem>>, vector<16x32xbf16>
    %cst_9 = arith.constant dense<0.000000e+00> : vector<8x32xf32>
    %20 = tpu.matmul %18, %19, %cst_9 {dimension_numbers = #tpu.dot_dimension_numbers<[1], [0], [0], [1], [0, 0, 1, 1], [], []>} : vector<8x16xbf16>, vector<16x32xbf16>, vector<8x32xf32> -> vector<8x32xf32>
    %c0_10 = arith.constant 0 : index
    %c0_11 = arith.constant 0 : index
    %21 = vector.load %arg4[%c0_10, %c0_11] : memref<1x32xf32, #tpu.memory_space<vmem>>, vector<1x32xf32>
    %22 = vector.broadcast %21 : vector<1x32xf32> to vector<8x32xf32>
    %23 = arith.addf %20, %22 : vector<8x32xf32>
    %cst_12 = arith.constant 0.000000e+00 : f32
    %24 = vector.broadcast %cst_12 : f32 to vector<8x32xf32>
    %25 = arith.maximumf %23, %24 : vector<8x32xf32>
    %26 = arith.truncf %25 : vector<8x32xf32> to vector<8x32xbf16>
    %c0_13 = arith.constant 0 : index
    %c0_14 = arith.constant 0 : index
    %27 = vector.load %arg5[%c0_13, %c0_14] : memref<32x64xbf16, #tpu.memory_space<vmem>>, vector<32x64xbf16>
    %cst_15 = arith.constant dense<0.000000e+00> : vector<8x64xf32>
    %28 = tpu.matmul %26, %27, %cst_15 {dimension_numbers = #tpu.dot_dimension_numbers<[1], [0], [0], [1], [0, 0, 1, 1], [], []>} : vector<8x32xbf16>, vector<32x64xbf16>, vector<8x64xf32> -> vector<8x64xf32>
    %c0_16 = arith.constant 0 : index
    %c0_17 = arith.constant 0 : index
    %29 = vector.load %arg6[%c0_16, %c0_17] : memref<1x64xf32, #tpu.memory_space<vmem>>, vector<1x64xf32>
    %30 = vector.broadcast %29 : vector<1x64xf32> to vector<8x64xf32>
    %31 = arith.addf %28, %30 : vector<8x64xf32>
    %32 = vector.extract_strided_slice %31 {offsets = [0, 0], sizes = [8, 32], strides = [1, 1]} : vector<8x64xf32> to vector<8x32xf32>
    %33 = vector.extract_strided_slice %31 {offsets = [0, 32], sizes = [8, 32], strides = [1, 1]} : vector<8x64xf32> to vector<8x32xf32>
    %34 = arith.mulf %32, %16 : vector<8x32xf32>
    %35 = arith.addf %34, %33 : vector<8x32xf32>
    %c0_18 = arith.constant 0 : index
    %c0_19 = arith.constant 0 : index
    %36 = vector.load %arg7[%c0_18, %c0_19] : memref<8x32xf32, #tpu.memory_space<vmem>>, vector<8x32xf32>
    tpu.vector_store %arg7[%c0_18, %c0_19], %35 {strides = array<i32>} : memref<8x32xf32, #tpu.memory_space<vmem>>, vector<8x32xf32>,
    return
  }
  func.func @transform_0(%arg0: i32) -> (i32, i32) {
    %c0_i32 = arith.constant 0 : i32
    %c0_i32_0 = arith.constant 0 : i32
    return %arg0, %c0_i32 : i32, i32
  }
  func.func @transform_1(%arg0: i32) -> (i32, i32) {
    %c0_i32 = arith.constant 0 : i32
    %c0_i32_0 = arith.constant 0 : i32
    return %arg0, %c0_i32 : i32, i32
  }
  func.func @transform_2(%arg0: i32) -> (i32, i32) {
    %c0_i32 = arith.constant 0 : i32
    %c0_i32_0 = arith.constant 0 : i32
    %c0_i32_1 = arith.constant 0 : i32
    return %c0_i32, %c0_i32_0 : i32, i32
  }
  func.func @transform_3(%arg0: i32) -> (i32, i32) {
    %c0_i32 = arith.constant 0 : i32
    %c0_i32_0 = arith.constant 0 : i32
    %c0_i32_1 = arith.constant 0 : i32
    return %c0_i32, %c0_i32_0 : i32, i32
  }
  func.func @transform_4(%arg0: i32) -> (i32, i32) {
    %c0_i32 = arith.constant 0 : i32
    %c0_i32_0 = arith.constant 0 : i32
    %c0_i32_1 = arith.constant 0 : i32
    return %c0_i32, %c0_i32_0 : i32, i32
  }
  func.func @transform_5(%arg0: i32) -> (i32, i32) {
    %c0_i32 = arith.constant 0 : i32
    %c0_i32_0 = arith.constant 0 : i32
    %c0_i32_1 = arith.constant 0 : i32
    return %c0_i32, %c0_i32_0 : i32, i32
  }
  func.func @transform_6(%arg0: i32) -> (i32, i32) {
    %c0_i32 = arith.constant 0 : i32
    %c0_i32_0 = arith.constant 0 : i32
    return %arg0, %c0_i32 : i32, i32
  }
}

</mosaic_0001>

<llo_original>
// kernel: tpu_custom_call.1
$region0: #{tpu_custom_call.1}
  #allocation0 [shape = 'u32[]', space=smem, size = 0x4, offset = 0x4, fixed_abs, tag = 'smem constant byte address 0x4 - core index']
  #allocation1 [shape = 'u32[72,128]{1,0:T(1,128)}', space=vmem, size = 0x9000, scoped, tag = 'internal scratch']
  %s0 = inlined_call_operand.hbm [shape: f32[16,32], index: 0, kind: input, shape index: {}]
  %s1 = inlined_call_operand.hbm [shape: f32[16,16], index: 1, kind: input, shape index: {}]
  %s2 = inlined_call_operand.hbm [shape: bf16[16,32], index: 2, kind: input, shape index: {}]
  %s3 = inlined_call_operand.vmem [shape: f32[1,32], index: 3, kind: input, shape index: {}]
  %s4 = inlined_call_operand.hbm [shape: bf16[32,64], index: 4, kind: input, shape index: {}]
  %s5 = inlined_call_operand.vmem [shape: f32[1,64], index: 5, kind: input, shape index: {}]
  %s6 = inlined_call_operand.hbm [shape: f32[16,32], index: 6, kind: output, shape index: {}]
  %s7 = sld [smem:[#allocation0]]
  $region73: #{tpu_custom_call.1} parent=0
    _
  %s9 = ssub.s32 1, %s7
  %s10 = scalar_select 0, %s9, %s7
  $region1: #{tpu_custom_call.1} parent=0
    #allocation2 [shape = 'u8[8192]{0}', space=vmem, size = 0x2000, scoped, tag = 'input window, operand 0']
    #allocation3 [shape = 's32[2]{0}', space=sflag, size = 0x8, scoped, tag = 'scoped memory for tpu_custom_call.1']
    #allocation4 [shape = 's32[2]{0}', space=sflag, size = 0x8, scoped, tag = 'scoped memory for tpu_custom_call.1']
    #allocation5 [shape = 'u8[8192]{0}', space=vmem, size = 0x2000, scoped, tag = 'input window, operand 1']
    #allocation6 [shape = 's32[2]{0}', space=sflag, size = 0x8, scoped, tag = 'scoped memory for tpu_custom_call.1']
    #allocation7 [shape = 'u8[4096]{0}', space=vmem, size = 0x1000, scoped, tag = 'input window, operand 2, single buffered']
    #allocation8 [shape = 'u8[8192]{0}', space=vmem, size = 0x2000, scoped, tag = 'input window, operand 4, single buffered']
    #allocation9 [shape = 's32[1]{0}', space=sflag, size = 0x4, scoped, tag = 'scoped memory for tpu_custom_call.1']
    #allocation10 [shape = 'u8[8192]{0}', space=vmem, size = 0x2000, scoped, tag = 'output window, operand 0']
    %11 = vsyncpa [#allocation3], 0
    %s12 = scalar_lea.sflag [#allocation3], 1
    %13 = vsyncpa %s12, 0
    %14 = vsyncpa [#allocation6], 0
    %s15 = scalar_lea.sflag [#allocation6], 1
    %16 = vsyncpa %s15, 0
    %17 = vsyncpa [#allocation9], 0
    %18 = vsyncpa [#allocation4], 0
    %s19 = scalar_lea.sflag [#allocation4], 1
    %20 = vsyncpa %s19, 0
    loop: start=0, step=1, limit=4
    $region2: #{tpu_custom_call.1} parent=1 // loop_pre_header
      _
    $region3: #{tpu_custom_call.1} parent=1 // loop_header
      %s22 = sphi 0, %s26
      %p23 = scmp.ge.s32.totalorder %s22, 4
      %s32 = sphi 0, %s34
      %s35 = sphi 0, %s32
      %s36 = sphi 0, %s35
      %s52 = sphi 0, %s36
      %s58 = sphi 0, %s60
      %s61 = sphi 0, %s58
      %s62 = sphi 0, %s61
      %s78 = sphi 0, %s62
      %s82 = sphi 0, %s82
      %s84 = sphi 0, %s82
      %s85 = sphi 0, %s84
      %s99 = sphi 0, %s85
      %s103 = sphi 0, %s103
      %s105 = sphi 0, %s103
      %s106 = sphi 0, %s105
      %s120 = sphi 0, %s106
      %s124 = sphi 0, %s124
      %s126 = sphi 0, %s124
      %s127 = sphi 0, %s126
      %s141 = sphi 0, %s127
      %s145 = sphi 0, %s145
      %s147 = sphi 0, %s145
      %s148 = sphi 0, %s147
      %s162 = sphi 0, %s148
      %s168 = sphi 0, %s170
      %s171 = sphi 0, %s168
      %s172 = sphi 0, %s171
      %s188 = sphi 0, %s172
    $region4: #{tpu_custom_call.1} parent=1 // loop_header_branch
      %25 = sbr.rel (%p23) target = $region8
    $region5: #{tpu_custom_call.1} parent=1 // loop_body
      %s27 = ssub.s32 %s22, 1
      %s28 = ssub.s32 %s22, 2
      %s29 = sadd.s32 %s22, 1
      %s30 = ssub.s32 %s22, %s29
      %p31 = scmp.eq.s32.totalorder %s30, 0
      %s33 = sadd.s32 %s32, 1
      %s34 = scalar_select %p31, %s32, %s33
      %p37 = pneg %p31
      %p38 = scmp.eq.s32.totalorder %s22, 1
      %p39 = por %p37, %p38
      %p40 = scmp.ne.s32.totalorder %s32, %s35
      %p41 = scmp.eq.s32.totalorder %s22, 0
      %p42 = por %p40, %p41
      %p43 = scmp.ne.s32.totalorder %s32, %s35
      %p44 = scmp.eq.s32.totalorder %s27, 1
      %p45 = por %p43, %p44
      %p46 = scmp.ne.s32.totalorder %s35, %s36
      %p47 = scmp.eq.s32.totalorder %s27, 0
      %p48 = por %p46, %p47
      %p49 = scmp.ne.s32.totalorder %s35, %s36
      %p50 = scmp.eq.s32.totalorder %s28, 1
      %p51 = por %p49, %p50
      %p53 = scmp.ne.s32.totalorder %s36, %s52
      %p54 = scmp.eq.s32.totalorder %s28, 0
      %p55 = por %p53, %p54
      %s56 = ssub.s32 %s22, %s29
      %p57 = scmp.eq.s32.totalorder %s56, 0
      %s59 = sadd.s32 %s58, 1
      %s60 = scalar_select %p57, %s58, %s59
      %p63 = pneg %p57
      %p64 = scmp.eq.s32.totalorder %s22, 1
      %p65 = por %p63, %p64
      %p66 = scmp.ne.s32.totalorder %s58, %s61
      %p67 = scmp.eq.s32.totalorder %s22, 0
      %p68 = por %p66, %p67
      %p69 = scmp.ne.s32.totalorder %s58, %s61
      %p70 = scmp.eq.s32.totalorder %s27, 1
      %p71 = por %p69, %p70
      %p72 = scmp.ne.s32.totalorder %s61, %s62
      %p73 = scmp.eq.s32.totalorder %s27, 0
      %p74 = por %p72, %p73
      %p75 = scmp.ne.s32.totalorder %s61, %s62
      %p76 = scmp.eq.s32.totalorder %s28, 1
      %p77 = por %p75, %p76
      %p79 = scmp.ne.s32.totalorder %s62, %s78
      %p80 = scmp.eq.s32.totalorder %s28, 0
      %p81 = por %p79, %p80
      %s83 = sadd.s32 %s82, 1
      %p86 = scmp.eq.s32.totalorder %s22, 1
      %p87 = scmp.ne.s32.totalorder %s82, %s84
      %p88 = scmp.eq.s32.totalorder %s22, 0
      %p89 = por %p87, %p88
      %p90 = scmp.ne.s32.totalorder %s82, %s84
      %p91 = scmp.eq.s32.totalorder %s27, 1
      %p92 = por %p90, %p91
      %p93 = scmp.ne.s32.totalorder %s84, %s85
      %p94 = scmp.eq.s32.totalorder %s27, 0
      %p95 = por %p93, %p94
      %p96 = scmp.ne.s32.totalorder %s84, %s85
      %p97 = scmp.eq.s32.totalorder %s28, 1
      %p98 = por %p96, %p97
      %p100 = scmp.ne.s32.totalorder %s85, %s99
      %p101 = scmp.eq.s32.totalorder %s28, 0
      %p102 = por %p100, %p101
      %s104 = sadd.s32 %s103, 1
      %p107 = scmp.eq.s32.totalorder %s22, 1
      %p108 = scmp.ne.s32.totalorder %s103, %s105
      %p109 = scmp.eq.s32.totalorder %s22, 0
      %p110 = por %p108, %p109
      %p111 = scmp.ne.s32.totalorder %s103, %s105
      %p112 = scmp.eq.s32.totalorder %s27, 1
      %p113 = por %p111, %p112
      %p114 = scmp.ne.s32.totalorder %s105, %s106
      %p115 = scmp.eq.s32.totalorder %s27, 0
      %p116 = por %p114, %p115
      %p117 = scmp.ne.s32.totalorder %s105, %s106
      %p118 = scmp.eq.s32.totalorder %s28, 1
      %p119 = por %p117, %p118
      %p121 = scmp.ne.s32.totalorder %s106, %s120
      %p122 = scmp.eq.s32.totalorder %s28, 0
      %p123 = por %p121, %p122
      %s125 = sadd.s32 %s124, 1
      %p128 = scmp.eq.s32.totalorder %s22, 1
      %p129 = scmp.ne.s32.totalorder %s124, %s126
      %p130 = scmp.eq.s32.totalorder %s22, 0
      %p131 = por %p129, %p130
      %p132 = scmp.ne.s32.totalorder %s124, %s126
      %p133 = scmp.eq.s32.totalorder %s27, 1
      %p134 = por %p132, %p133
      %p135 = scmp.ne.s32.totalorder %s126, %s127
      %p136 = scmp.eq.s32.totalorder %s27, 0
      %p137 = por %p135, %p136
      %p138 = scmp.ne.s32.totalorder %s126, %s127
      %p139 = scmp.eq.s32.totalorder %s28, 1
      %p140 = por %p138, %p139
      %p142 = scmp.ne.s32.totalorder %s127, %s141
      %p143 = scmp.eq.s32.totalorder %s28, 0
      %p144 = por %p142, %p143
      %s146 = sadd.s32 %s145, 1
      %p149 = scmp.eq.s32.totalorder %s22, 1
      %p150 = scmp.ne.s32.totalorder %s145, %s147
      %p151 = scmp.eq.s32.totalorder %s22, 0
      %p152 = por %p150, %p151
      %p153 = scmp.ne.s32.totalorder %s145, %s147
      %p154 = scmp.eq.s32.totalorder %s27, 1
      %p155 = por %p153, %p154
      %p156 = scmp.ne.s32.totalorder %s147, %s148
      %p157 = scmp.eq.s32.totalorder %s27, 0
      %p158 = por %p156, %p157
      %p159 = scmp.ne.s32.totalorder %s147, %s148
      %p160 = scmp.eq.s32.totalorder %s28, 1
      %p161 = por %p159, %p160
      %p163 = scmp.ne.s32.totalorder %s148, %s162
      %p164 = scmp.eq.s32.totalorder %s28, 0
      %p165 = por %p163, %p164
      %s166 = ssub.s32 %s22, %s29
      %p167 = scmp.eq.s32.totalorder %s166, 0
      %s169 = sadd.s32 %s168, 1
      %s170 = scalar_select %p167, %s168, %s169
      %p173 = pneg %p167
      %p174 = scmp.eq.s32.totalorder %s22, 1
      %p175 = por %p173, %p174
      %p176 = scmp.ne.s32.totalorder %s168, %s171
      %p177 = scmp.eq.s32.totalorder %s22, 0
      %p178 = por %p176, %p177
      %p179 = scmp.ne.s32.totalorder %s168, %s171
      %p180 = scmp.eq.s32.totalorder %s27, 1
      %p181 = por %p179, %p180
      %p182 = scmp.ne.s32.totalorder %s171, %s172
      %p183 = scmp.eq.s32.totalorder %s27, 0
      %p184 = por %p182, %p183
      %p185 = scmp.ne.s32.totalorder %s171, %s172
      %p186 = scmp.eq.s32.totalorder %s28, 1
      %p187 = por %p185, %p186
      %p189 = scmp.ne.s32.totalorder %s172, %s188
      %p190 = scmp.eq.s32.totalorder %s28, 0
      %p191 = por %p189, %p190
      %p192 = scmp.le.s32.totalorder 1, %s22
      %p193 = scmp.lt.s32.totalorder %s22, 3
      %p194 = pnand %p192, %p193
      %p195 = pneg %p194
      // Predicated region
      $region9: #{tpu_custom_call.1} parent=5 // pred_check
        _
      $region10: #{tpu_custom_call.1} parent=5 // pred_check_branch
        %197 = sbr.rel (%p194) target = $region12
      $region11: #{tpu_custom_call.1} parent=5 // pred_region
        %s198 = ssub.s32 %s22, 1
        // Predicated region
        $region13: #{tpu_custom_call.1} parent=11 // pred_check
          %p199 = pneg %p95
        $region14: #{tpu_custom_call.1} parent=11 // pred_check_branch
          %201 = sbr.rel (%p199) target = $region16
        $region15: #{tpu_custom_call.1} parent=11 // pred_region
          %203 = vsyncadd [#allocation6], 0
          %s204 = sshll.u32 %s2, 4
          %s205 = int_to_ptr.hbm [resolvable:$true] %s204
          %s206 = sshll.u32 [#allocation7], 4
          %s207 = int_to_ptr.vmem [resolvable:$true] %s206
          %212 = dma.hbm_to_vmem [thread:$0]  %s205, 128, %s207, [#allocation6], 64, 64, 4
        $region16: #{tpu_custom_call.1} parent=11 // pred_fallthru
          _
        // Predicated region
        $region17: #{tpu_custom_call.1} parent=11 // pred_check
          %p213 = pneg %p116
        $region18: #{tpu_custom_call.1} parent=11 // pred_check_branch
          %215 = sbr.rel (%p213) target = $region20
        $region19: #{tpu_custom_call.1} parent=11 // pred_region
          _
        $region20: #{tpu_custom_call.1} parent=11 // pred_fallthru
          _
        // Predicated region
        $region21: #{tpu_custom_call.1} parent=11 // pred_check
          %p216 = pneg %p137
        $region22: #{tpu_custom_call.1} parent=11 // pred_check_branch
          %218 = sbr.rel (%p216) target = $region24
        $region23: #{tpu_custom_call.1} parent=11 // pred_region
          %220 = vsyncadd [#allocation9], 0
          %s221 = sshll.u32 %s4, 4
          %s222 = int_to_ptr.hbm [resolvable:$true] %s221
          %s223 = sshll.u32 [#allocation8], 4
          %s224 = int_to_ptr.vmem [resolvable:$true] %s223
          %229 = dma.hbm_to_vmem [thread:$0]  %s222, 256, %s224, [#allocation9], 64, 64, 4
        $region24: #{tpu_custom_call.1} parent=11 // pred_fallthru
          _
        // Predicated region
        $region25: #{tpu_custom_call.1} parent=11 // pred_check
          %p230 = pneg %p158
        $region26: #{tpu_custom_call.1} parent=11 // pred_check_branch
          %232 = sbr.rel (%p230) target = $region28
        $region27: #{tpu_custom_call.1} parent=11 // pred_region
          _
        $region28: #{tpu_custom_call.1} parent=11 // pred_fallthru
          _
      $region12: #{tpu_custom_call.1} parent=5 // pred_fallthru
        _
      %p233 = scmp.lt.s32.totalorder %s22, 2
      // Predicated region
      $region29: #{tpu_custom_call.1} parent=5 // pred_check
        %p234 = pneg %p233
      $region30: #{tpu_custom_call.1} parent=5 // pred_check_branch
        %236 = sbr.rel (%p234) target = $region32
      $region31: #{tpu_custom_call.1} parent=5 // pred_region
        // Predicated region
        $region33: #{tpu_custom_call.1} parent=31 // pred_check
          %p237 = pneg %p42
        $region34: #{tpu_custom_call.1} parent=31 // pred_check_branch
          %239 = sbr.rel (%p237) target = $region36
        $region35: #{tpu_custom_call.1} parent=31 // pred_region
          %s240 = sand.u32 %s32, 1
          %s241 = scalar_lea.sflag [#allocation3], %s240
          %s242 = sand.u32 %s32, 1
          %s243 = smul.addr %s242, 8
          %s244 = scalar_lea.vmem [#allocation2], %s243
          %246 = vsyncadd %s241, 0
          %s247 = smul.addr %s22, 8
          %s248 = scalar_lea.hbm %s0, %s247
          %s250 = sshll.u32 %s248, 4
          %s251 = int_to_ptr.hbm [resolvable:$true] %s250
          %s252 = sshll.u32 %s244, 4
          %s253 = int_to_ptr.vmem [resolvable:$true] %s252
          %255 = dma.hbm_to_vmem [thread:$0]  %s251, 128, %s253, %s241
        $region36: #{tpu_custom_call.1} parent=31 // pred_fallthru
          _
        // Predicated region
        $region37: #{tpu_custom_call.1} parent=31 // pred_check
          %p256 = pneg %p68
        $region38: #{tpu_custom_call.1} parent=31 // pred_check_branch
          %258 = sbr.rel (%p256) target = $region40
        $region39: #{tpu_custom_call.1} parent=31 // pred_region
          %s259 = sand.u32 %s22, 1
          %s260 = scalar_lea.sflag [#allocation6], %s259
          %s261 = sand.u32 %s58, 1
          %s262 = smul.addr %s261, 8
          %s263 = scalar_lea.vmem [#allocation5], %s262
          %265 = vsyncadd %s260, 0
          %s266 = smul.addr %s22, 8
          %s267 = scalar_lea.hbm %s1, %s266
          %s269 = sshll.u32 %s267, 4
          %s270 = int_to_ptr.hbm [resolvable:$true] %s269
          %s271 = sshll.u32 %s263, 4
          %s272 = int_to_ptr.vmem [resolvable:$true] %s271
          %274 = dma.hbm_to_vmem [thread:$0]  %s270, 128, %s272, %s260
        $region40: #{tpu_custom_call.1} parent=31 // pred_fallthru
          _
      $region32: #{tpu_custom_call.1} parent=5 // pred_fallthru
        _
      %p275 = scmp.le.s32.totalorder 1, %s22
      %p276 = scmp.lt.s32.totalorder %s22, 3
      %p277 = pnand %p275, %p276
      %p278 = pneg %p277
      // Predicated region
      $region41: #{tpu_custom_call.1} parent=5 // pred_check
        _
      $region42: #{tpu_custom_call.1} parent=5 // pred_check_branch
        %280 = sbr.rel (%p277) target = $region44
      $region43: #{tpu_custom_call.1} parent=5 // pred_region
        %s281 = ssub.s32 %s22, 1
        %s282 = sand.u32 %s35, 1
        %s283 = scalar_lea.sflag [#allocation3], %s282
        %s284 = sand.u32 %s35, 1
        %s285 = smul.addr %s284, 8
        %s286 = scalar_lea.vmem [#allocation2], %s285
        // Predicated region
        $region45: #{tpu_custom_call.1} parent=43 // pred_check
          %p287 = pneg %p48
        $region46: #{tpu_custom_call.1} parent=43 // pred_check_branch
          %289 = sbr.rel (%p287) target = $region48
        $region47: #{tpu_custom_call.1} parent=43 // pred_region
          %291 = dma.done %s283, 128
        $region48: #{tpu_custom_call.1} parent=43 // pred_fallthru
          _
        %s292 = sand.u32 %s27, 1
        %s293 = scalar_lea.sflag [#allocation6], %s292
        %s294 = sand.u32 %s61, 1
        %s295 = smul.addr %s294, 8
        %s296 = scalar_lea.vmem [#allocation5], %s295
        // Predicated region
        $region49: #{tpu_custom_call.1} parent=43 // pred_check
          %p297 = pneg %p74
        $region50: #{tpu_custom_call.1} parent=43 // pred_check_branch
          %299 = sbr.rel (%p297) target = $region52
        $region51: #{tpu_custom_call.1} parent=43 // pred_region
          %301 = dma.done %s293, 128
        $region52: #{tpu_custom_call.1} parent=43 // pred_fallthru
          _
        // Predicated region
        $region53: #{tpu_custom_call.1} parent=43 // pred_check
          %p302 = pneg %p95
        $region54: #{tpu_custom_call.1} parent=43 // pred_check_branch
          %304 = sbr.rel (%p302) target = $region56
        $region55: #{tpu_custom_call.1} parent=43 // pred_region
          %306 = dma.done [#allocation6], 128
        $region56: #{tpu_custom_call.1} parent=43 // pred_fallthru
          _
        // Predicated region
        $region57: #{tpu_custom_call.1} parent=43 // pred_check
          %p307 = pneg %p137
        $region58: #{tpu_custom_call.1} parent=43 // pred_check_branch
          %309 = sbr.rel (%p307) target = $region60
        $region59: #{tpu_custom_call.1} parent=43 // pred_region
          %311 = dma.done [#allocation9], 256
        $region60: #{tpu_custom_call.1} parent=43 // pred_fallthru
          _
        %s312 = sand.u32 %s35, 1
        %s313 = scalar_lea.sflag [#allocation3], %s312
        %s314 = sand.u32 %s35, 1
        %s315 = smul.addr %s314, 8
        %s316 = scalar_lea.vmem [#allocation2], %s315
        %p317 = pneg %p48
        %p318 = pneg %p45
        %s319 = sand.u32 %s27, 1
        %s320 = scalar_lea.sflag [#allocation6], %s319
        %s321 = sand.u32 %s61, 1
        %s322 = smul.addr %s321, 8
        %s323 = scalar_lea.vmem [#allocation5], %s322
        %p324 = pneg %p74
        %p325 = pneg %p71
        %p326 = pneg %p95
        %p327 = pneg %p92
        %p328 = pneg %p116
        %p329 = pneg %p113
        %p330 = pneg %p137
        %p331 = pneg %p134
        %p332 = pneg %p158
        %p333 = pneg %p155
        %p334 = pneg %p184
        %p335 = pneg %p181
        %s336 = sand.u32 %s171, 1
        %s337 = scalar_lea.sflag [#allocation4], %s336
        %s338 = sand.u32 %s171, 1
        %s339 = smul.addr %s338, 8
        %s340 = scalar_lea.vmem [#allocation10], %s339
        %v342 = vld [vmem:[%s286] sm:$0xff]
        %vm343 = vcmask 261120
        %v344 = vsel %vm343, %v342, 0.0
        %345 = vadd.xlane.f32.xlu0 %v344
        %v346 = vpop.xlane.xlu0 %345
        %v347 = vrcp.pop 32.0
        %v348 = vmul.f32 32.0, %v347
        %v349 = vsub.f32 1.0, %v348
        %v350 = vmul.f32 %v347, %v349
        %v351 = vadd.f32 %v347, %v350
        %vm352 = vweird.f32 %v347
        %v353 = vsel %vm352, %v347, %v351
        %v354 = vmul.f32 %v346, %v353
        %v355 = vsub.f32 %v342, %v354
        %v356 = vmul.f32 %v355, %v355
        %v357 = vsel %vm343, %v356, 0.0
        %358 = vadd.xlane.f32.xlu0 %v357
        %v359 = vpop.xlane.xlu0 %358
        %v360 = vmul.f32 %v359, %v353
        %v361 = vadd.f32 %v360, 1e-05
        %v362 = vrsqrt.pop %v361
        %v363 = vmul.f32 %v362, %v361
        %v364 = vmul.f32 %v363, %v362
        %v365 = vmul.f32 0.5, %v364
        %v366 = vsub.f32 1.5, %v365
        %v367 = vmul.f32 %v362, %v366
        %vm368 = vweird.f32 %v361
        %vm369 = vweird.f32 %v362
        %vm370 = vmor %vm368, %vm369
        %v371 = vsel %vm370, %v362, %v367
        %v372 = vmul.f32 %v355, %v371
        %v373 = vld [vmem:[%s296] sm:$0xff]
        %v374 = vpack.c.bf16 %v373, %v373
        %v375 = vld [vmem:[#allocation7] sm:$0xf]
        %v376 = vld [vmem:[#allocation7 + $0x4] sm:$0xf]
        %v377 = vld [vmem:[%s3] sm:$0x1]
        %v379 = vperm.slane %v377, 0
        %v383 = vunpack.c.l.b16 %v375
        %v384 = vunpack.c.l.b16 %v376
        %v385 = vpack.c.b16 %v384, %v383
        %vm387 = vcmask 130048
        %v389 = vsel %vm387, %v374, 0
        %391 = vmatpush.bf16.msra.mxu0 0
        %392 = vmatpush.bf16.msra.mxu0 0
        %393 = vmatpush.bf16.msra.mxu0 0
        %394 = vmatpush.bf16.msra.mxu0 0
        %395 = vmatpush.bf16.msra.mxu0 0
        %396 = vmatpush.bf16.msra.mxu0 0
        %397 = vmatpush.bf16.msra.mxu0 0
        %398 = vmatpush.bf16.msra.mxu0 %v385
        %399 = vmatmul.bf16.gmra.mxu0 %v389
        %v400 = vpop.f32.mrf.mxu0
        %v401 = vadd.f32 %v379, %v400
        %v402 = vpop.f32.mrf.mxu0
        %403 = vdwg.mxu0
        %v404 = vmax.f32 %v401, 0.0
        %v405 = vpack.c.bf16 %v404, %v404
        %v406 = vld [vmem:[#allocation8] sm:$0xf]
        %v407 = vld [vmem:[#allocation8 + $0x4] sm:$0xf]
        %v408 = vld [vmem:[#allocation8 + $0x8] sm:$0xf]
        %v409 = vld [vmem:[#allocation8 + $0xc] sm:$0xf]
        %v410 = vld [vmem:[%s5] sm:$0x1]
        %v412 = vperm.slane %v410, 0
        %v418 = vunpack.c.l.b16 %v406
        %v419 = vunpack.c.l.b16 %v407
        %v420 = vunpack.c.l.b16 %v408
        %v421 = vunpack.c.l.b16 %v409
        %v422 = vpack.c.b16 %v419, %v418
        %v423 = vpack.c.b16 %v421, %v420
        %v427 = vsel %vm343, %v405, 0
        %429 = vmatpush.bf16.msra.mxu0 0
        %430 = vmatpush.bf16.msra.mxu0 0
        %431 = vmatpush.bf16.msra.mxu0 0
        %432 = vmatpush.bf16.msra.mxu0 0
        %433 = vmatpush.bf16.msra.mxu0 0
        %434 = vmatpush.bf16.msra.mxu0 0
        %435 = vmatpush.bf16.msra.mxu0 %v423
        %436 = vmatpush.bf16.msra.mxu0 %v422
        %437 = vmatmul.bf16.gmra.mxu0 %v427
        %v438 = vpop.f32.mrf.mxu0
        %v439 = vadd.f32 %v412, %v438
        %v440 = vpop.f32.mrf.mxu0
        %441 = vdwg.mxu0
        %v442 = vmul.f32 %v439, %v372
        %444 = vrot.lane.b32.xlu0 %v439, 96
        %v445 = vpop.permute.xlu0 %444
        %v447 = vadd.f32 %v442, %v445
        %448 = vst.msk [vmem:[%s340] sm:$0xff] %vm343, %v447
        %s449 = sand.u32 %s171, 1
        %s450 = scalar_lea.sflag [#allocation4], %s449
        %s451 = sand.u32 %s171, 1
        %s452 = smul.addr %s451, 8
        %s453 = scalar_lea.vmem [#allocation10], %s452
        // Predicated region
        $region61: #{tpu_custom_call.1} parent=43 // pred_check
          %p454 = pneg %p181
        $region62: #{tpu_custom_call.1} parent=43 // pred_check_branch
          %456 = sbr.rel (%p454) target = $region64
        $region63: #{tpu_custom_call.1} parent=43 // pred_region
          %458 = vsyncadd %s450, 0
          %s459 = smul.addr %s27, 8
          %s460 = scalar_lea.hbm %s6, %s459
          %s462 = sshll.u32 %s453, 4
          %s463 = int_to_ptr.vmem [resolvable:$true] %s462
          %s464 = sshll.u32 %s460, 4
          %s465 = int_to_ptr.hbm [resolvable:$true] %s464
          %467 = dma.vmem_to_hbm [thread:$0]  %s463, 128, %s465, %s450
        $region64: #{tpu_custom_call.1} parent=43 // pred_fallthru
          _
      $region44: #{tpu_custom_call.1} parent=5 // pred_fallthru
        _
      %p468 = scmp.le.s32.totalorder 2, %s22
      // Predicated region
      $region65: #{tpu_custom_call.1} parent=5 // pred_check
        %p469 = pneg %p468
      $region66: #{tpu_custom_call.1} parent=5 // pred_check_branch
        %471 = sbr.rel (%p469) target = $region68
      $region67: #{tpu_custom_call.1} parent=5 // pred_region
        %s472 = ssub.s32 %s22, 2
        // Predicated region
        $region69: #{tpu_custom_call.1} parent=67 // pred_check
          %p473 = pneg %p187
        $region70: #{tpu_custom_call.1} parent=67 // pred_check_branch
          %475 = sbr.rel (%p473) target = $region72
        $region71: #{tpu_custom_call.1} parent=67 // pred_region
          %s476 = sand.u32 %s172, 1
          %s477 = scalar_lea.sflag [#allocation4], %s476
          %s478 = sand.u32 %s172, 1
          %s479 = smul.addr %s478, 8
          %s480 = scalar_lea.vmem [#allocation10], %s479
          %482 = dma.done %s477, 128
        $region72: #{tpu_custom_call.1} parent=67 // pred_fallthru
          _
      $region68: #{tpu_custom_call.1} parent=5 // pred_fallthru
        _
    $region6: #{tpu_custom_call.1} parent=1 // loop_footer
      %s26 = sadd.s32 1, %s22
    $region7: #{tpu_custom_call.1} parent=1 // loop_footer_branch
      %21 = sbr.rel target = $region3
    $region8: #{tpu_custom_call.1} parent=1 // loop_exit
      _
    %483 = vsyncpa [#allocation3], 1
    %s484 = scalar_lea.sflag [#allocation3], 1
    %485 = vsyncpa %s484, 1
    %486 = vsyncpa [#allocation6], 1
    %s487 = scalar_lea.sflag [#allocation6], 1
    %488 = vsyncpa %s487, 1
    %489 = vsyncpa [#allocation9], 1
    %490 = vsyncpa [#allocation4], 1
    %s491 = scalar_lea.sflag [#allocation4], 1
    %492 = vsyncpa %s491, 1

</llo_original>
